<compile_context>
chip_gen: v5e
topology: v5e:2x2
jax: 0.10.0
libtpu: 0.0.40
codegen_flags: <defaults>
</compile_context>

<pallas_src>
import functools

import jax
import jax.numpy as jnp
import numpy as np
from jax.experimental import pallas as pl
from jax.experimental.pallas import tpu as pltpu

EPS = 1e-5

# Tile caps.  Row cap 256 / lane cap 512 keeps every kernel's VMEM budget well
# under the 16/32 MiB scoped defaults (v5e/v6e, v7x) even at ViT-H widths.
# (v5e could bump the row cap to 512 together with a vmem_limit_bytes raise.)
_ROW_CAP = 256    # multiple of 8 (sublane)
_LANE_CAP = 512   # multiple of 128 (lane)


def _row_tile(m, cap=_ROW_CAP):
    return m if m <= cap else cap


def _lane_tile(n, cap=_LANE_CAP):
    return n if n <= cap else cap


def _red_tile(k, caps=(512, 256, 128)):
    """Reduction-axis tile: exact divisor only (partial K tiles would pollute the acc)."""
    if k <= caps[0]:
        return k
    for c in caps:
        if k % c == 0:
            return c
    return k


# ------------------------------ Pallas kernels ------------------------------ #

def _ln_linear_kernel(*refs, has_bias):
    """LayerNorm(x) @ W (+ bias); LN cached in VMEM scratch across output tiles."""
    if has_bias:
        x_ref, g_ref, b_ref, w_ref, bias_ref, o_ref, h_scr = refs
    else:
        x_ref, g_ref, b_ref, w_ref, o_ref, h_scr = refs
        bias_ref = None
    j = pl.program_id(1)

    @pl.when(j == 0)
    def _():
        x = x_ref[...].astype(jnp.float32)
        mu = jnp.mean(x, axis=-1, keepdims=True)
        var = jnp.mean(jnp.square(x - mu), axis=-1, keepdims=True)
        h = (x - mu) * jax.lax.rsqrt(var + EPS)
        h = h * g_ref[...].astype(jnp.float32) + b_ref[...].astype(jnp.float32)
        h_scr[...] = h.astype(h_scr.dtype)

    y = jnp.dot(h_scr[...], w_ref[...], preferred_element_type=jnp.float32)
    if has_bias:
        y = y + bias_ref[...].astype(jnp.float32)
    o_ref[...] = y.astype(o_ref.dtype)


def ln_linear(x2d, gamma, beta, w, bias=None):
    """LayerNorm over the last dim of x2d (M, K), then @ w (K, N) [+ bias]."""
    M, K = x2d.shape
    N = w.shape[1]
    tm = _row_tile(M)
    tn = _lane_tile(N)
    grid = (pl.cdiv(M, tm), pl.cdiv(N, tn))
    in_specs = [
        pl.BlockSpec((tm, K), lambda i, j: (i, 0)),
        pl.BlockSpec((1, K), lambda i, j: (0, 0)),
        pl.BlockSpec((1, K), lambda i, j: (0, 0)),
        pl.BlockSpec((K, tn), lambda i, j: (0, j)),
    ]
    args = [x2d, gamma.reshape(1, K), beta.reshape(1, K), w]
    if bias is not None:
        in_specs.append(pl.BlockSpec((1, tn), lambda i, j: (0, j)))
        args.append(bias.reshape(1, N))
    return pl.pallas_call(
        functools.partial(_ln_linear_kernel, has_bias=bias is not None),
        out_shape=jax.ShapeDtypeStruct((M, N), x2d.dtype),
        grid=grid,
        in_specs=in_specs,
        out_specs=pl.BlockSpec((tm, tn), lambda i, j: (i, j)),
        scratch_shapes=[pltpu.VMEM((tm, K), w.dtype)],
        compiler_params=pltpu.CompilerParams(
            dimension_semantics=("parallel", "arbitrary")),
    )(*args)


def _ln_mlp_res_kernel(x_ref, g_ref, b_ref, w1_ref, b1_ref, w2_ref, b2_ref,
                       o_ref, h_scr, acc_ref, *, act):
    """Fused: LN(x) -> @W1(+b1)(+act) -> @W2 -> +b2 -> +x, K2 tiled as the reduction."""
    k = pl.program_id(1)

    @pl.when(k == 0)
    def _():
        x = x_ref[...].astype(jnp.float32)
        mu = jnp.mean(x, axis=-1, keepdims=True)
        var = jnp.mean(jnp.square(x - mu), axis=-1, keepdims=True)
        h = (x - mu) * jax.lax.rsqrt(var + EPS)
        h = h * g_ref[...].astype(jnp.float32) + b_ref[...].astype(jnp.float32)
        h_scr[...] = h.astype(h_scr.dtype)
        acc_ref[...] = jnp.zeros_like(acc_ref)

    t = jnp.dot(h_scr[...], w1_ref[...], preferred_element_type=jnp.float32)
    t = t + b1_ref[...].astype(jnp.float32)
    if act == "quick_gelu":                       # CLIP's QuickGELU
        t = t * jax.nn.sigmoid(1.702 * t)
    acc_ref[...] += jnp.dot(t.astype(w2_ref.dtype), w2_ref[...],
                            preferred_element_type=jnp.float32)

    @pl.when(k == pl.num_programs(1) - 1)
    def _():
        y = acc_ref[...] + b2_ref[...].astype(jnp.float32) + x_ref[...].astype(jnp.float32)
        o_ref[...] = y.astype(o_ref.dtype)


def ln_mlp_res(x2d, gamma, beta, w1, b1, w2, b2, act=None):
    """x + W2( act(LN(x) @ W1 + b1) ) + b2, with the intermediate dim as K reduction."""
    M, D = x2d.shape
    K2 = w1.shape[1]
    tm = _row_tile(M)
    tk = _red_tile(K2)
    grid = (pl.cdiv(M, tm), K2 // tk)
    return pl.pallas_call(
        functools.partial(_ln_mlp_res_kernel, act=act),
        out_shape=jax.ShapeDtypeStruct((M, D), x2d.dtype),
        grid=grid,
        in_specs=[
            pl.BlockSpec((tm, D), lambda i, k: (i, 0)),
            pl.BlockSpec((1, D), lambda i, k: (0, 0)),
            pl.BlockSpec((1, D), lambda i, k: (0, 0)),
            pl.BlockSpec((D, tk), lambda i, k: (0, k)),
            pl.BlockSpec((1, tk), lambda i, k: (0, k)),
            pl.BlockSpec((tk, D), lambda i, k: (k, 0)),
            pl.BlockSpec((1, D), lambda i, k: (0, 0)),
        ],
        out_specs=pl.BlockSpec((tm, D), lambda i, k: (i, 0)),
        scratch_shapes=[pltpu.VMEM((tm, D), w1.dtype),
                        pltpu.VMEM((tm, D), jnp.float32)],
        compiler_params=pltpu.CompilerParams(
            dimension_semantics=("parallel", "arbitrary")),
    )(x2d, gamma.reshape(1, D), beta.reshape(1, D),
      w1, b1.reshape(1, K2), w2, b2.reshape(1, D))


def _attn_outproj_kernel(qkv_ref, x_ref, w_ref, b_ref, o_ref, a_scr, *, heads,
                         approx_recip):
    """Multi-head attention + fused out_proj + bias + residual for nb batch elems."""
    nb, L, D3 = qkv_ref.shape
    D = D3 // 3
    hd = D // heads
    qkv = qkv_ref[...]
    for h in range(heads):                              # static unroll over heads
        qh = qkv[:, :, h * hd:(h + 1) * hd]             # scale already folded into W_q
        kh = qkv[:, :, D + h * hd:D + (h + 1) * hd]
        vh = qkv[:, :, 2 * D + h * hd:2 * D + (h + 1) * hd]
        s = jnp.einsum("bld,bmd->blm", qh, kh, preferred_element_type=jnp.float32)
        s = s - jnp.max(s, axis=-1, keepdims=True)
        p = jnp.exp(s)
        denom = jnp.sum(p, axis=-1, keepdims=True)
        if approx_recip:
            p = p * pl.reciprocal(denom, approx=True)
        else:
            p = p / denom
        # direct per-head store into the VMEM slab (no lane-concat of head outputs)
        a_scr[:, :, h * hd:(h + 1) * hd] = jnp.einsum(
            "blm,bmd->bld", p.astype(vh.dtype), vh,
            preferred_element_type=jnp.float32).astype(a_scr.dtype)
    w = w_ref[...]
    bias = b_ref[...].astype(jnp.float32)
    for bi in range(nb):                                # fused out_proj + residual
        y = jnp.dot(a_scr[bi], w, preferred_element_type=jnp.float32)
        o_ref[bi] = (y + bias + x_ref[bi].astype(jnp.float32)).astype(o_ref.dtype)


def attention_outproj(qkv, x, out_w, out_b, heads, approx_recip=True):
    """qkv: (N, L, 3D) fused projections -> x + out_proj(MHA) : (N, L, D)."""
    N, L, D3 = qkv.shape
    D = D3 // 3
    nb = min(2, N)                                      # batch elems per grid step
    return pl.pallas_call(
        functools.partial(_attn_outproj_kernel, heads=heads,
                          approx_recip=approx_recip),
        out_shape=jax.ShapeDtypeStruct((N, L, D), x.dtype),
        grid=(pl.cdiv(N, nb),),
        in_specs=[
            pl.BlockSpec((nb, L, D3), lambda n: (n, 0, 0)),
            pl.BlockSpec((nb, L, D), lambda n: (n, 0, 0)),
            pl.BlockSpec((D, D), lambda n: (0, 0)),      # out_w resident in VMEM
            pl.BlockSpec((1, D), lambda n: (0, 0)),
        ],
        out_specs=pl.BlockSpec((nb, L, D), lambda n: (n, 0, 0)),
        scratch_shapes=[pltpu.VMEM((nb, L, D), qkv.dtype)],
        compiler_params=pltpu.CompilerParams(dimension_semantics=("parallel",)),
    )(qkv, x, out_w, out_b.reshape(1, D))


# -------------------------- model built from kernels ------------------------ #

def resblock(x, p, heads, identity_attn):
    """One CLIP ResidualAttentionBlock. x: (N, L, D) batch-major."""
    N, L, D = x.shape
    x2d = x.reshape(N * L, D)

    if identity_attn:
        # ignore_last_attn: attention map == I, so the attention output is exactly V.
        # Fuse LN1 -> V projection -> out_proj -> +bias -> +residual in one kernel;
        # the Q/K two-thirds of in_proj are dead work and are skipped.
        x2d = ln_mlp_res(x2d, p["ln1_g"], p["ln1_b"],
                         p["in_w"][:, 2 * D:], p["in_b"][2 * D:],
                         p["out_w"], p["out_b"], act=None)
    else:
        qkv = ln_linear(x2d, p["ln1_g"], p["ln1_b"], p["in_w"], p["in_b"])
        x = attention_outproj(qkv.reshape(N, L, 3 * D), x, p["out_w"], p["out_b"], heads)
        x2d = x.reshape(N * L, D)

    # fused MLP: LN2 -> c_fc -> QuickGELU -> c_proj -> +bias -> +residual
    x2d = ln_mlp_res(x2d, p["ln2_g"], p["ln2_b"], p["fc_w"], p["fc_b"],
                     p["cproj_w"], p["cproj_b"], act="quick_gelu")
    return x2d.reshape(N, L, D)


def masker_backbone_forward(x, params, heads, spatial=True, ignore_last_attn=True):
    """x: (L, N, D) CLIP-convention tokens. Returns (N, L, out) or (N, out)."""
    L, N, D = x.shape
    # single transpose into batch-major layout; absorbs the PyTorch permute(1, 0, 2)
    x = x.transpose(1, 0, 2)                                    # (N, L, D)
    layers = len(params["blocks"])
    for i, bp in enumerate(params["blocks"]):
        x = resblock(x, bp, heads, ignore_last_attn and (i == layers - 1))
    if spatial:
        # fused ln_post + (bias-free) proj
        y = ln_linear(x.reshape(N * L, D), params["ln_post_g"], params["ln_post_b"],
                      params["proj"])
        return y.reshape(N, L, -1)
    else:
        return ln_linear(x[:, 0, :], params["ln_post_g"], params["ln_post_b"],
                         params["proj"])
    # TODO(synk): proj=None fallback (ln_post only, no projection) is not wired up.


def prepare_params(params, heads, dtype=jnp.bfloat16):
    """Host-side, one-time transforms: fold 1/sqrt(head_dim) into the Q columns of
    in_proj (weight AND bias) in f32, then cast everything to the compute dtype."""
    def c(t):
        return t.astype(dtype)

    blocks = []
    for p in params["blocks"]:
        D = p["in_w"].shape[0]
        scale = 1.0 / float(np.sqrt(D // heads))
        q_scaled_w = p["in_w"].at[:, :D].multiply(scale)
        q_scaled_b = p["in_b"].at[:D].multiply(scale)
        np_ = dict(p, in_w=q_scaled_w, in_b=q_scaled_b)
        blocks.append({k: c(v) for k, v in np_.items()})
    return dict(blocks=blocks,
                ln_post_g=c(params["ln_post_g"]),
                ln_post_b=c(params["ln_post_b"]),
                proj=c(params["proj"]))


# ------------------------------ pure-JAX reference -------------------------- #

def ref_forward(x, params, heads, spatial=True, ignore_last_attn=True):
    def ln(t, g, b):
        mu = t.mean(-1, keepdims=True)
        var = ((t - mu) ** 2).mean(-1, keepdims=True)
        return (t - mu) / jnp.sqrt(var + EPS) * g + b

    layers = len(params["blocks"])
    L, N, D = x.shape
    hd = D // heads
    for i, p in enumerate(params["blocks"]):
        ident = ignore_last_attn and (i == layers - 1)
        h = ln(x, p["ln1_g"], p["ln1_b"])
        qkv = h @ p["in_w"] + p["in_b"]
        q, k, v = jnp.split(qkv, 3, axis=-1)
        split = lambda t: t.reshape(L, N, heads, hd).transpose(1, 2, 0, 3)
        q, k, v = split(q), split(k), split(v)
        if ident:
            a = v
        else:
            s = jnp.einsum("bhld,bhmd->bhlm", q, k) / np.sqrt(hd)
            a = jnp.einsum("bhlm,bhmd->bhld", jax.nn.softmax(s, axis=-1), v)
        a = a.transpose(2, 0, 1, 3).reshape(L, N, D)
        x = x + a @ p["out_w"] + p["out_b"]
        h = ln(x, p["ln2_g"], p["ln2_b"])
        h = h @ p["fc_w"] + p["fc_b"]
        h = h * jax.nn.sigmoid(1.702 * h)
        x = x + h @ p["cproj_w"] + p["cproj_b"]
    x = x.transpose(1, 0, 2)
    if spatial:
        x = ln(x, params["ln_post_g"], params["ln_post_b"])
    else:
        x = ln(x[:, 0, :], params["ln_post_g"], params["ln_post_b"])
    return x @ params["proj"]


# --------------------------------- main ------------------------------------ #

def init_params(key, layers, width, heads, output_dim):
    ks = jax.random.split(key, 2 + layers)
    blocks = []
    for i in range(layers):
        bk = jax.random.split(ks[i], 12)
        blocks.append(dict(
            ln1_g=1.0 + 0.01 * jax.random.normal(bk[0], (width,), jnp.float32),
            ln1_b=0.01 * jax.random.normal(bk[1], (width,), jnp.float32),
            in_w=0.02 * jax.random.normal(bk[2], (width, 3 * width), jnp.float32),
            in_b=0.01 * jax.random.normal(bk[3], (3 * width,), jnp.float32),
            out_w=0.02 * jax.random.normal(bk[4], (width, width), jnp.float32),
            out_b=0.01 * jax.random.normal(bk[5], (width,), jnp.float32),
            ln2_g=1.0 + 0.01 * jax.random.normal(bk[6], (width,), jnp.float32),
            ln2_b=0.01 * jax.random.normal(bk[7], (width,), jnp.float32),
            fc_w=0.02 * jax.random.normal(bk[8], (width, 4 * width), jnp.float32),
            fc_b=0.01 * jax.random.normal(bk[9], (4 * width,), jnp.float32),
            cproj_w=0.02 * jax.random.normal(bk[10], (4 * width, width), jnp.float32),
            cproj_b=0.01 * jax.random.normal(bk[11], (width,), jnp.float32),
        ))
    pk = jax.random.split(ks[layers], 3)
    return dict(
        blocks=blocks,
        ln_post_g=1.0 + 0.01 * jax.random.normal(pk[0], (width,), jnp.float32),
        ln_post_b=0.01 * jax.random.normal(pk[1], (width,), jnp.float32),
        proj=0.05 * jax.random.normal(pk[2], (width, output_dim), jnp.float32),
    )


if __name__ == "__main__":
    # small, CLIP-consistent shapes: seq L = 1 cls + 9 patches, batch N, width D
    L, N, D, HEADS, LAYERS, OUT = 10, 2, 32, 4, 2, 16

    key = jax.random.PRNGKey(0)
    kx, kp = jax.random.split(key)
    params_f32 = init_params(kp, LAYERS, D, HEADS, OUT)
    x_f32 = jax.random.normal(kx, (L, N, D), jnp.float32)   # transformer input (L,N,D)

    # production path: bf16 weights/activations, f32 accumulation inside kernels
    dtype = jnp.bfloat16
    prepared = prepare_params(params_f32, HEADS, dtype=dtype)
    x = x_f32.astype(dtype)

    out = masker_backbone_forward(x, prepared, HEADS, spatial=True, ignore_last_attn=True)
    out = jax.block_until_ready(out)

    # reference: f32 math on the SAME bf16-quantized weights/inputs (no scale folding),
    # so the comparison isolates bf16 compute/rounding + the EUP approx reciprocal.
    params_ref = jax.tree_util.tree_map(
        lambda t: t.astype(dtype).astype(jnp.float32), params_f32)
    ref = ref_forward(x.astype(jnp.float32), params_ref, HEADS,
                      spatial=True, ignore_last_attn=True)

    np.testing.assert_allclose(np.asarray(out, dtype=np.float32), np.asarray(ref),
                               rtol=3e-2, atol=3e-2)
    assert out.shape == (N, L, OUT)
    print("KERNEL_OK")
</pallas_src>

<mosaic_0001>
module attributes {stable_mosaic.version = 11 : i64} {
  func.func @_ln_linear_kernel(%arg0: i32, %arg1: i32, %arg2: memref<20x32xbf16, #tpu.memory_space<vmem>>, %arg3: memref<1x32xbf16, #tpu.memory_space<vmem>>, %arg4: memref<1x32xbf16, #tpu.memory_space<vmem>>, %arg5: memref<32x96xbf16, #tpu.memory_space<vmem>>, %arg6: memref<1x96xbf16, #tpu.memory_space<vmem>>, %arg7: memref<20x96xbf16, #tpu.memory_space<vmem>>, %arg8: memref<20x32xbf16, #tpu.memory_space<vmem>>) attributes {dimension_semantics = [#tpu.dimension_semantics<parallel>, #tpu.dimension_semantics<arbitrary>], iteration_bounds = array<i64: 1, 1>, scalar_prefetch = 0 : i64, scratch_operands = 1 : i64, tpu.core_type = #tpu.core_type<tc>, window_params = [{transform_indices = @transform_0, window_bounds = array<i64: 20, 32>}, {pipeline_mode = #tpu.pipeline_mode<synchronous>, transform_indices = @transform_1, window_bounds = array<i64: 1, 32>}, {pipeline_mode = #tpu.pipeline_mode<synchronous>, transform_indices = @transform_2, window_bounds = array<i64: 1, 32>}, {transform_indices = @transform_3, window_bounds = array<i64: 32, 96>}, {transform_indices = @transform_4, window_bounds = array<i64: 1, 96>}, {transform_indices = @transform_5, window_bounds = array<i64: 20, 96>}]} {
    %c0_i32 = arith.constant 0 : i32
    %0 = arith.cmpi eq, %arg1, %c0_i32 : i32
    %1 = arith.extui %0 : i1 to i32
    %c0_i32_0 = arith.constant 0 : i32
    %2 = arith.cmpi ne, %1, %c0_i32_0 : i32
    scf.if %2 {
      %c0_8 = arith.constant 0 : index
      %c0_9 = arith.constant 0 : index
      %12 = vector.load %arg2[%c0_8, %c0_9] : memref<20x32xbf16, #tpu.memory_space<vmem>>, vector<20x32xbf16>
      %13 = arith.extf %12 : vector<20x32xbf16> to vector<20x32xf32>
      %cst_10 = arith.constant dense<0.000000e+00> : vector<20xf32>
      %14 = vector.multi_reduction <add>, %13, %cst_10 [1] : vector<20x32xf32> to vector<20xf32>
      %15 = vector.shape_cast %14 : vector<20xf32> to vector<20x1xf32>
      %cst_11 = arith.constant 3.200000e+01 : f32
      %16 = vector.broadcast %cst_11 : f32 to vector<20x1xf32>
      %17 = arith.divf %15, %16 : vector<20x1xf32>
      %18 = vector.broadcast %17 : vector<20x1xf32> to vector<20x32xf32>
      %19 = arith.subf %13, %18 : vector<20x32xf32>
      %20 = arith.mulf %19, %19 : vector<20x32xf32>
      %cst_12 = arith.constant dense<0.000000e+00> : vector<20xf32>
      %21 = vector.multi_reduction <add>, %20, %cst_12 [1] : vector<20x32xf32> to vector<20xf32>
      %22 = vector.shape_cast %21 : vector<20xf32> to vector<20x1xf32>
      %cst_13 = arith.constant 3.200000e+01 : f32
      %23 = vector.broadcast %cst_13 : f32 to vector<20x1xf32>
      %24 = arith.divf %22, %23 : vector<20x1xf32>
      %25 = vector.broadcast %17 : vector<20x1xf32> to vector<20x32xf32>
      %26 = arith.subf %13, %25 : vector<20x32xf32>
      %cst_14 = arith.constant 9.99999974E-6 : f32
      %27 = vector.broadcast %cst_14 : f32 to vector<20x1xf32>
      %28 = arith.addf %24, %27 : vector<20x1xf32>
      %29 = math.rsqrt %28 : vector<20x1xf32>
      %30 = vector.broadcast %29 : vector<20x1xf32> to vector<20x32xf32>
      %31 = arith.mulf %26, %30 : vector<20x32xf32>
      %c0_15 = arith.constant 0 : index
      %c0_16 = arith.constant 0 : index
      %32 = vector.load %arg3[%c0_15, %c0_16] : memref<1x32xbf16, #tpu.memory_space<vmem>>, vector<1x32xbf16>
      %33 = arith.extf %32 : vector<1x32xbf16> to vector<1x32xf32>
      %34 = vector.broadcast %33 : vector<1x32xf32> to vector<20x32xf32>
      %35 = arith.mulf %31, %34 : vector<20x32xf32>
      %c0_17 = arith.constant 0 : index
      %c0_18 = arith.constant 0 : index
      %36 = vector.load %arg4[%c0_17, %c0_18] : memref<1x32xbf16, #tpu.memory_space<vmem>>, vector<1x32xbf16>
      %37 = arith.extf %36 : vector<1x32xbf16> to vector<1x32xf32>
      %38 = vector.broadcast %37 : vector<1x32xf32> to vector<20x32xf32>
      %39 = arith.addf %35, %38 : vector<20x32xf32>
      %40 = arith.truncf %39 : vector<20x32xf32> to vector<20x32xbf16>
      %c0_19 = arith.constant 0 : index
      %c0_20 = arith.constant 0 : index
      %41 = vector.load %arg8[%c0_19, %c0_20] : memref<20x32xbf16, #tpu.memory_space<vmem>>, vector<20x32xbf16>
      tpu.vector_store %arg8[%c0_19, %c0_20], %40 {strides = array<i32>} : memref<20x32xbf16, #tpu.memory_space<vmem>>, vector<20x32xbf16>,
    } else {
    }
    %c0 = arith.constant 0 : index
    %c0_1 = arith.constant 0 : index
    %3 = vector.load %arg8[%c0, %c0_1] : memref<20x32xbf16, #tpu.memory_space<vmem>>, vector<20x32xbf16>
    %c0_2 = arith.constant 0 : index
    %c0_3 = arith.constant 0 : index
    %4 = vector.load %arg5[%c0_2, %c0_3] : memref<32x96xbf16, #tpu.memory_space<vmem>>, vector<32x96xbf16>
    %cst = arith.constant dense<0.000000e+00> : vector<20x96xf32>
    %5 = tpu.matmul %3, %4, %cst {dimension_numbers = #tpu.dot_dimension_numbers<[1], [0], [0], [1], [0, 0, 1, 1], [], []>} : vector<20x32xbf16>, vector<32x96xbf16>, vector<20x96xf32> -> vector<20x96xf32>
    %c0_4 = arith.constant 0 : index
    %c0_5 = arith.constant 0 : index
    %6 = vector.load %arg6[%c0_4, %c0_5] : memref<1x96xbf16, #tpu.memory_space<vmem>>, vector<1x96xbf16>
    %7 = arith.extf %6 : vector<1x96xbf16> to vector<1x96xf32>
    %8 = vector.broadcast %7 : vector<1x96xf32> to vector<20x96xf32>
    %9 = arith.addf %5, %8 : vector<20x96xf32>
    %10 = arith.truncf %9 : vector<20x96xf32> to vector<20x96xbf16>
    %c0_6 = arith.constant 0 : index
    %c0_7 = arith.constant 0 : index
    %11 = vector.load %arg7[%c0_6, %c0_7] : memref<20x96xbf16, #tpu.memory_space<vmem>>, vector<20x96xbf16>
    tpu.vector_store %arg7[%c0_6, %c0_7], %10 {strides = array<i32>} : memref<20x96xbf16, #tpu.memory_space<vmem>>, vector<20x96xbf16>,
    return
  }
  func.func @transform_0(%arg0: i32, %arg1: i32) -> (i32, i32) {
    %c0_i32 = arith.constant 0 : i32
    %c0_i32_0 = arith.constant 0 : i32
    return %arg0, %c0_i32 : i32, i32
  }
  func.func @transform_1(%arg0: i32, %arg1: i32) -> (i32, i32) {
    %c0_i32 = arith.constant 0 : i32
    %c0_i32_0 = arith.constant 0 : i32
    %c0_i32_1 = arith.constant 0 : i32
    return %c0_i32, %c0_i32_0 : i32, i32
  }
  func.func @transform_2(%arg0: i32, %arg1: i32) -> (i32, i32) {
    %c0_i32 = arith.constant 0 : i32
    %c0_i32_0 = arith.constant 0 : i32
    %c0_i32_1 = arith.constant 0 : i32
    return %c0_i32, %c0_i32_0 : i32, i32
  }
  func.func @transform_3(%arg0: i32, %arg1: i32) -> (i32, i32) {
    %c0_i32 = arith.constant 0 : i32
    %c0_i32_0 = arith.constant 0 : i32
    return %c0_i32, %arg1 : i32, i32
  }
  func.func @transform_4(%arg0: i32, %arg1: i32) -> (i32, i32) {
    %c0_i32 = arith.constant 0 : i32
    %c0_i32_0 = arith.constant 0 : i32
    return %c0_i32, %arg1 : i32, i32
  }
  func.func @transform_5(%arg0: i32, %arg1: i32) -> (i32, i32) {
    %c0_i32 = arith.constant 0 : i32
    return %arg0, %arg1 : i32, i32
  }
}

</mosaic_0001>

<llo_original>
// kernel: tpu_custom_call.1
$region0: #{tpu_custom_call.1}
  #allocation0 [shape = 'u32[]', space=smem, size = 0x4, offset = 0x4, fixed_abs, tag = 'smem constant byte address 0x4 - core index']
  #allocation1 [shape = 'u32[72,128]{1,0:T(1,128)}', space=vmem, size = 0x9000, scoped, tag = 'internal scratch']
  #allocation2 [shape = 'bf16[20,32]{1,0:T(8,128)(2,1)}', space=vmem, size = 0x1800, scoped, tag = 'scratch operand']
  %s0 = inlined_call_operand.hbm [shape: bf16[20,32], index: 0, kind: input, shape index: {}]
  %s1 = inlined_call_operand.hbm [shape: bf16[1,32], index: 1, kind: input, shape index: {}]
  %s2 = inlined_call_operand.vmem [shape: bf16[1,32], index: 2, kind: input, shape index: {}]
  %s3 = inlined_call_operand.hbm [shape: bf16[32,96], index: 3, kind: input, shape index: {}]
  %s4 = inlined_call_operand.vmem [shape: bf16[1,96], index: 4, kind: input, shape index: {}]
  %s5 = inlined_call_operand.hbm [shape: bf16[20,96], index: 5, kind: output, shape index: {}]
  %s6 = sld [smem:[#allocation0]]
  $region46: #{tpu_custom_call.1} parent=0
    _
  %s8 = ssub.s32 1, %s6
  %s9 = scalar_select 0, %s8, %s6
  $region1: #{tpu_custom_call.1} parent=0
    #allocation3 [shape = 'u8[6144]{0}', space=vmem, size = 0x1800, scoped, tag = 'input window, operand 0, single buffered']
    #allocation4 [shape = 's32[1]{0}', space=sflag, size = 0x4, scoped, tag = 'scoped memory for tpu_custom_call.1']
    #allocation5 [shape = 's32[1]{0}', space=sflag, size = 0x4, scoped, tag = 'scoped memory for tpu_custom_call.1']
    #allocation6 [shape = 'u8[512]{0}', space=vmem, size = 0x400, scoped, tag = 'input window, operand 1, single buffered']
    #allocation7 [shape = 's32[1]{0}', space=sflag, size = 0x4, scoped, tag = 'scoped memory for tpu_custom_call.1']
    #allocation8 [shape = 'u8[8192]{0}', space=vmem, size = 0x2000, scoped, tag = 'input window, operand 3, single buffered']
    #allocation9 [shape = 'u8[6144]{0}', space=vmem, size = 0x1800, scoped, tag = 'output window, operand 0, single buffered']
    %10 = vsyncpa [#allocation4], 0
    %11 = vsyncpa [#allocation7], 0
    %12 = vsyncpa [#allocation5], 0
    // Predicated region
    $region2: #{tpu_custom_call.1} parent=1 // pred_check
      _
    $region3: #{tpu_custom_call.1} parent=1 // pred_check_branch
      %14 = sbr.rel (0) target = $region5
    $region4: #{tpu_custom_call.1} parent=1 // pred_region
      %16 = vsyncadd [#allocation4], 0
      %s17 = sshll.u32 %s0, 4
      %s18 = int_to_ptr.hbm [resolvable:$true] %s17
      %s19 = sshll.u32 [#allocation3], 4
      %s20 = int_to_ptr.vmem [resolvable:$true] %s19
      %25 = dma.hbm_to_vmem [thread:$0]  %s18, 192, %s20, [#allocation4], 64, 64, 4
    $region5: #{tpu_custom_call.1} parent=1 // pred_fallthru
      _
    // Predicated region
    $region6: #{tpu_custom_call.1} parent=1 // pred_check
      _
    $region7: #{tpu_custom_call.1} parent=1 // pred_check_branch
      %27 = sbr.rel (0) target = $region9
    $region8: #{tpu_custom_call.1} parent=1 // pred_region
      %29 = vsyncadd [#allocation7], 0
      %s31 = sshll.u32 %s1, 4
      %s32 = int_to_ptr.hbm [resolvable:$true] %s31
      %s33 = sshll.u32 [#allocation6], 4
      %s34 = int_to_ptr.vmem [resolvable:$true] %s33
      %36 = dma.hbm_to_vmem [thread:$0]  %s32, 16, %s34, [#allocation7]
    $region9: #{tpu_custom_call.1} parent=1 // pred_fallthru
      _
    // Predicated region
    $region10: #{tpu_custom_call.1} parent=1 // pred_check
      _
    $region11: #{tpu_custom_call.1} parent=1 // pred_check_branch
      %38 = sbr.rel (0) target = $region13
    $region12: #{tpu_custom_call.1} parent=1 // pred_region
      _
    $region13: #{tpu_custom_call.1} parent=1 // pred_fallthru
      _
    // Predicated region
    $region14: #{tpu_custom_call.1} parent=1 // pred_check
      _
    $region15: #{tpu_custom_call.1} parent=1 // pred_check_branch
      %40 = sbr.rel (0) target = $region17
    $region16: #{tpu_custom_call.1} parent=1 // pred_region
      %42 = vsyncadd [#allocation7], 0
      %s43 = sshll.u32 %s3, 4
      %s44 = int_to_ptr.hbm [resolvable:$true] %s43
      %s45 = sshll.u32 [#allocation8], 4
      %s46 = int_to_ptr.vmem [resolvable:$true] %s45
      %51 = dma.hbm_to_vmem [thread:$0]  %s44, 256, %s46, [#allocation7], 64, 64, 4
    $region17: #{tpu_custom_call.1} parent=1 // pred_fallthru
      _
    // Predicated region
    $region18: #{tpu_custom_call.1} parent=1 // pred_check
      _
    $region19: #{tpu_custom_call.1} parent=1 // pred_check_branch
      %53 = sbr.rel (0) target = $region21
    $region20: #{tpu_custom_call.1} parent=1 // pred_region
      _
    $region21: #{tpu_custom_call.1} parent=1 // pred_fallthru
      _
    // Predicated region
    $region22: #{tpu_custom_call.1} parent=1 // pred_check
      _
    $region23: #{tpu_custom_call.1} parent=1 // pred_check_branch
      %55 = sbr.rel (0) target = $region25
    $region24: #{tpu_custom_call.1} parent=1 // pred_region
      %57 = dma.done [#allocation4], 192
    $region25: #{tpu_custom_call.1} parent=1 // pred_fallthru
      _
    // Predicated region
    $region26: #{tpu_custom_call.1} parent=1 // pred_check
      _
    $region27: #{tpu_custom_call.1} parent=1 // pred_check_branch
      %59 = sbr.rel (0) target = $region29
    $region28: #{tpu_custom_call.1} parent=1 // pred_region
      %61 = dma.done [#allocation7], 16
    $region29: #{tpu_custom_call.1} parent=1 // pred_fallthru
      _
    // Predicated region
    $region30: #{tpu_custom_call.1} parent=1 // pred_check
      _
    $region31: #{tpu_custom_call.1} parent=1 // pred_check_branch
      %63 = sbr.rel (0) target = $region33
    $region32: #{tpu_custom_call.1} parent=1 // pred_region
      %65 = dma.done [#allocation7], 256
    $region33: #{tpu_custom_call.1} parent=1 // pred_fallthru
      _
    %p67 = scmp.eq.s32.totalorder 0, 0
    // Predicated region
    $region34: #{tpu_custom_call.1} parent=1 // pred_check
      %p68 = pneg %p67
    $region35: #{tpu_custom_call.1} parent=1 // pred_check_branch
      %70 = sbr.rel (%p68) target = $region37
    $region36: #{tpu_custom_call.1} parent=1 // pred_region
      %v71 = vld [vmem:[#allocation3] sm:$0xf]
      %v72 = vld [vmem:[#allocation3 + $0x4] sm:$0xf]
      %v73 = vld [vmem:[#allocation3 + $0x8] sm:$0x3]
      %v74 = vunpack.c.l.bf16 %v71
      %v75 = vunpack.c.l.bf16 %v72
      %v76 = vunpack.c.l.bf16 %v73
      %vm77 = vcmask 261120
      %v78 = vsel %vm77, %v74, 0.0
      %79 = vadd.xlane.f32.xlu0 %v78
      %v80 = vpop.xlane.xlu0 %79
      %v81 = vsel %vm77, %v75, 0.0
      %82 = vadd.xlane.f32.xlu0 %v81
      %v83 = vpop.xlane.xlu0 %82
      %vm84 = vcmask 257024
      %v85 = vsel %vm84, %v76, 0.0
      %86 = vadd.xlane.f32.xlu0 %v85
      %v87 = vpop.xlane.xlu0 %86
      %v88 = vrcp.pop 32.0
      %v89 = vmul.f32 32.0, %v88
      %v90 = vsub.f32 1.0, %v89
      %v91 = vmul.f32 %v88, %v90
      %v92 = vadd.f32 %v88, %v91
      %vm93 = vweird.f32 %v88
      %v94 = vsel %vm93, %v88, %v92
      %v95 = vmul.f32 %v80, %v94
      %v96 = vmul.f32 %v83, %v94
      %v97 = vmul.f32 %v87, %v94
      %v98 = vsub.f32 %v74, %v95
      %v99 = vsub.f32 %v75, %v96
      %v100 = vsub.f32 %v76, %v97
      %v101 = vmul.f32 %v98, %v98
      %v102 = vmul.f32 %v99, %v99
      %v103 = vmul.f32 %v100, %v100
      %v104 = vsel %vm77, %v101, 0.0
      %105 = vadd.xlane.f32.xlu0 %v104
      %v106 = vpop.xlane.xlu0 %105
      %v107 = vsel %vm77, %v102, 0.0
      %108 = vadd.xlane.f32.xlu0 %v107
      %v109 = vpop.xlane.xlu0 %108
      %v110 = vsel %vm84, %v103, 0.0
      %111 = vadd.xlane.f32.xlu0 %v110
      %v112 = vpop.xlane.xlu0 %111
      %v113 = vmul.f32 %v106, %v94
      %v114 = vmul.f32 %v109, %v94
      %v115 = vmul.f32 %v112, %v94
      %v116 = vadd.f32 %v113, 1e-05
      %v117 = vadd.f32 %v114, 1e-05
      %v118 = vadd.f32 %v115, 1e-05
      %v119 = vrsqrt.pop %v116
      %v120 = vmul.f32 %v119, %v116
      %v121 = vmul.f32 %v120, %v119
      %v122 = vmul.f32 0.5, %v121
      %v123 = vsub.f32 1.5, %v122
      %v124 = vmul.f32 %v119, %v123
      %vm125 = vweird.f32 %v116
      %vm126 = vweird.f32 %v119
      %vm127 = vmor %vm125, %vm126
      %v128 = vsel %vm127, %v119, %v124
      %v129 = vrsqrt.pop %v117
      %v130 = vmul.f32 %v129, %v117
      %v131 = vmul.f32 %v130, %v129
      %v132 = vmul.f32 0.5, %v131
      %v133 = vsub.f32 1.5, %v132
      %v134 = vmul.f32 %v129, %v133
      %vm135 = vweird.f32 %v117
      %vm136 = vweird.f32 %v129
      %vm137 = vmor %vm135, %vm136
      %v138 = vsel %vm137, %v129, %v134
      %v139 = vrsqrt.pop %v118
      %v140 = vmul.f32 %v139, %v118
      %v141 = vmul.f32 %v140, %v139
      %v142 = vmul.f32 0.5, %v141
      %v143 = vsub.f32 1.5, %v142
      %v144 = vmul.f32 %v139, %v143
      %vm145 = vweird.f32 %v118
      %vm146 = vweird.f32 %v139
      %vm147 = vmor %vm145, %vm146
      %v148 = vsel %vm147, %v139, %v144
      %v149 = vmul.f32 %v98, %v128
      %v150 = vmul.f32 %v99, %v138
      %v151 = vmul.f32 %v100, %v148
      %v152 = vld [vmem:[#allocation6] sm:$0x1]
      %v153 = vunpack.c.l.bf16 %v152
      %v154 = vperm.slane %v153, 0
      %v155 = vmul.f32 %v149, %v154
      %v156 = vmul.f32 %v150, %v154
      %v157 = vmul.f32 %v151, %v154
      %v158 = vld [vmem:[%s2] sm:$0x1]
      %v159 = vunpack.c.l.bf16 %v158
      %v160 = vperm.slane %v159, 0
      %v161 = vadd.f32 %v155, %v160
      %v162 = vadd.f32 %v156, %v160
      %v163 = vadd.f32 %v157, %v160
      %v164 = vpack.c.bf16 %v161, %v161
      %v165 = vpack.c.bf16 %v162, %v162
      %v166 = vpack.c.bf16 %v163, %v163
      %167 = vst.msk [vmem:[#allocation2] sm:$0xf] %vm84, %v164
      %168 = vst.msk [vmem:[#allocation2 + $0x4] sm:$0xf] %vm84, %v165
      %vm169 = vcmask 254976
      %170 = vst.msk [vmem:[#allocation2 + $0x8] sm:$0x3] %vm169, %v166
    $region37: #{tpu_custom_call.1} parent=1 // pred_fallthru
      _
    %v171 = vld [vmem:[#allocation2] sm:$0xf]
    %v172 = vld [vmem:[#allocation2 + $0x4] sm:$0xf]
    %v173 = vld [vmem:[#allocation2 + $0x8] sm:$0x3]
    %v174 = vld [vmem:[#allocation8] sm:$0xf]
    %v175 = vld [vmem:[#allocation8 + $0x4] sm:$0xf]
    %v176 = vld [vmem:[#allocation8 + $0x8] sm:$0xf]
    %v177 = vld [vmem:[#allocation8 + $0xc] sm:$0xf]
    %v178 = vld [vmem:[%s4] sm:$0x1]
    %v179 = vunpack.c.l.bf16 %v178
    %v180 = vperm.slane %v179, 0
    %v184 = vunpack.c.l.b16 %v171
    %v185 = vunpack.c.l.b16 %v172
    %v186 = vunpack.c.l.b16 %v173
    %v187 = vpack.c.b16 %v185, %v184
    %v188 = vpack.c.b16 %v186, %v186
    %v193 = vunpack.c.l.b16 %v174
    %v194 = vunpack.c.l.b16 %v175
    %v195 = vunpack.c.l.b16 %v176
    %v196 = vunpack.c.l.b16 %v177
    %v197 = vpack.c.b16 %v194, %v193
    %v198 = vpack.c.b16 %v196, %v195
    %vm201 = vcmask 261120
    %v203 = vsel %vm201, %v187, 0
    %v206 = vsel %vm201, %v188, 0
    %208 = vmatpush.bf16.msra.mxu0 0
    %209 = vmatpush.bf16.msra.mxu0 0
    %210 = vmatpush.bf16.msra.mxu0 0
    %211 = vmatpush.bf16.msra.mxu0 0
    %212 = vmatpush.bf16.msra.mxu0 0
    %213 = vmatpush.bf16.msra.mxu0 0
    %214 = vmatpush.bf16.msra.mxu0 %v198
    %215 = vmatpush.bf16.msra.mxu0 %v197
    %216 = vmatmul.bf16.gmra.mxu0 %v203
    %v217 = vpop.f32.mrf.mxu0
    %v218 = vadd.f32 %v180, %v217
    %v219 = vpop.f32.mrf.mxu0
    %v220 = vadd.f32 %v180, %v219
    %221 = vmatmul.bf16.gmra.mxu0 %v206
    %v222 = vpop.f32.mrf.mxu0
    %v223 = vadd.f32 %v180, %v222
    %v224 = vpop.f32.mrf.mxu0
    %225 = vdwg.mxu0
    %v226 = vpack.c.bf16 %v218, %v218
    %v227 = vpack.c.bf16 %v220, %v220
    %v228 = vpack.c.bf16 %v223, %v223
    %vm229 = vcmask 781312
    %230 = vst.msk [vmem:[#allocation9] sm:$0xf] %vm229, %v226
    %231 = vst.msk [vmem:[#allocation9 + $0x4] sm:$0xf] %vm229, %v227
    %vm232 = vcmask 779264
    %233 = vst.msk [vmem:[#allocation9 + $0x8] sm:$0x3] %vm232, %v228
    // Predicated region
    $region38: #{tpu_custom_call.1} parent=1 // pred_check
      _
    $region39: #{tpu_custom_call.1} parent=1 // pred_check_branch
      %235 = sbr.rel (0) target = $region41
    $region40: #{tpu_custom_call.1} parent=1 // pred_region
      %237 = vsyncadd [#allocation5], 0
      %s238 = sshll.u32 [#allocation9], 4
      %s239 = int_to_ptr.vmem [resolvable:$true] %s238
      %s240 = sshll.u32 %s5, 4
      %s241 = int_to_ptr.hbm [resolvable:$true] %s240
      %246 = dma.vmem_to_hbm [thread:$0]  %s239, 192, %s241, [#allocation5], 64, 64, 4
    $region41: #{tpu_custom_call.1} parent=1 // pred_fallthru
      _
    // Predicated region
    $region42: #{tpu_custom_call.1} parent=1 // pred_check
      _
    $region43: #{tpu_custom_call.1} parent=1 // pred_check_branch
      %248 = sbr.rel (0) target = $region45
    $region44: #{tpu_custom_call.1} parent=1 // pred_region
      %250 = dma.done [#allocation5], 192
    $region45: #{tpu_custom_call.1} parent=1 // pred_fallthru
      _
    %251 = vsyncpa [#allocation4], 1
    %252 = vsyncpa [#allocation7], 1
    %253 = vsyncpa [#allocation5], 1

</llo_original>
